<compile_context>
chip_gen: v6e
topology: v6e:2x2x1
jax: 0.10.0
libtpu: 0.0.40
codegen_flags: <defaults>
</compile_context>

<pallas_src>
import functools

import jax
import jax.numpy as jnp
from jax.experimental import pallas as pl
from jax.experimental.pallas import tpu as pltpu

LANE = 128     # lane-dense channel padding
SUBLANE = 8    # sublane tile for the node axis


def _round_up(v, m):
    return ((v + m - 1) // m) * m


def _gcn_fused_kernel(adj_ref, x_ref, w_ref, b_ref, out_ref, *,
                      num_layers, agg_first):
    """All GCN layers in one kernel.

    adj_ref: [Np, Np]           f32 (zero-padded rows/cols beyond the real N)
    x_ref  : [Np, C_pad]        f32, channels zero-padded to LANE
    w_ref  : [L, C_pad, C_pad]  f32, per-layer weights zero-padded
    b_ref  : [L, 1, C_pad]      f32, per-layer biases zero-padded
    out_ref: [Np, C_pad]
    """
    adj = adj_ref[...]
    h = x_ref[...]
    for l in range(num_layers):          # L is tiny -> static unroll
        w = w_ref[l]                     # (C_pad, C_pad)
        b = b_ref[l]                     # (1, C_pad)
        if agg_first[l]:
            # (adj @ h) @ W : cheaper when c_in <= c_out
            y = jnp.dot(jnp.dot(adj, h, preferred_element_type=jnp.float32),
                        w, preferred_element_type=jnp.float32)
        else:
            # adj @ (h @ W) : cheaper when c_out < c_in (cuts the N^2 term)
            y = jnp.dot(adj, jnp.dot(h, w, preferred_element_type=jnp.float32),
                        preferred_element_type=jnp.float32)
        y = y + b
        if l < num_layers - 1:
            y = jnp.maximum(y, 0.0)      # ReLU on every layer except the last
        h = y
    out_ref[...] = h.astype(out_ref.dtype)


def gcn_forward(x, adj, params):
    """Fused GCN forward (batch_norm=False, dropout=0.0, drop_input=False, residual=False)."""
    N, c_in = x.shape
    num_layers = len(params)
    c_out = params[-1][0].shape[1]
    c_pad = LANE
    n_pad = _round_up(N, SUBLANE)

    # Per-layer matmul-order choice based on the *real* channel dims.
    dims = [c_in] + [w.shape[1] for (w, _) in params]
    agg_first = tuple(dims[l] <= dims[l + 1] for l in range(num_layers))

    # Lane-dense, zero-padded operands (exact: padded lanes/rows stay zero or are
    # annihilated by the zero-padded adjacency columns through every layer).
    adj_p = jnp.zeros((n_pad, n_pad), jnp.float32).at[:N, :N].set(adj.astype(jnp.float32))
    x_p = jnp.zeros((n_pad, c_pad), jnp.float32).at[:N, :c_in].set(x.astype(jnp.float32))
    w_stack = jnp.zeros((num_layers, c_pad, c_pad), jnp.float32)
    b_stack = jnp.zeros((num_layers, 1, c_pad), jnp.float32)
    for l, (w, b) in enumerate(params):
        fi, fo = w.shape
        w_stack = w_stack.at[l, :fi, :fo].set(w.astype(jnp.float32))
        b_stack = b_stack.at[l, 0, :fo].set(b.astype(jnp.float32))

    kernel = functools.partial(_gcn_fused_kernel,
                               num_layers=num_layers, agg_first=agg_first)

    out_p = pl.pallas_call(
        kernel,
        out_shape=jax.ShapeDtypeStruct((n_pad, c_pad), jnp.float32),
        grid=(1,),
        in_specs=[
            pl.BlockSpec((n_pad, n_pad), lambda i: (0, 0)),                 # adj (loaded once)
            pl.BlockSpec((n_pad, c_pad), lambda i: (0, 0)),                 # x   (lane-dense)
            pl.BlockSpec((num_layers, c_pad, c_pad), lambda i: (0, 0, 0)),  # all weights
            pl.BlockSpec((num_layers, 1, c_pad), lambda i: (0, 0, 0)),      # all biases
        ],
        out_specs=pl.BlockSpec((n_pad, c_pad), lambda i: (0, 0)),           # lane-dense output
        compiler_params=pltpu.CompilerParams(
            dimension_semantics=("arbitrary",)),
    )(adj_p, x_p, w_stack, b_stack)

    return out_p[:N, :c_out].astype(x.dtype)


def init_gcn_params(key, hidden_channels, num_layers, in_channels, out_channels):
    """Deterministic PyTorch-Linear-style init: U(-1/sqrt(fan_in), 1/sqrt(fan_in)).

    Weights are stored as [fan_in, fan_out] (i.e. transposed vs. torch)."""
    dims = [in_channels] + [hidden_channels] * (num_layers - 1) + [out_channels]
    params = []
    for li in range(num_layers):
        fan_in, fan_out = dims[li], dims[li + 1]
        key, kw, kb = jax.random.split(key, 3)
        bound = 1.0 / jnp.sqrt(jnp.float32(fan_in))
        w = jax.random.uniform(kw, (fan_in, fan_out), jnp.float32, -bound, bound)
        b = jax.random.uniform(kb, (fan_out,), jnp.float32, -bound, bound)
        params.append((w, b))
    return params


def gcn_reference(x, adj, params):
    """Plain-JAX reference for sanity checking."""
    num_layers = len(params)
    for i in range(num_layers - 1):
        w, b = params[i]
        x = jnp.maximum(adj @ x @ w + b, 0.0)
    w, b = params[-1]
    return adj @ x @ w + b


if __name__ == "__main__":
    # Small shapes: N=16 nodes, in=8, hidden=32, out=8, 3 layers.
    N, in_channels, hidden_channels, out_channels, num_layers = 16, 8, 32, 8, 3

    key = jax.random.PRNGKey(0)
    kx, kadj, kparam = jax.random.split(key, 3)

    x = jax.random.normal(kx, (N, in_channels), jnp.float32)
    # symmetric, row-normalized-ish adjacency (dense)
    a = jax.random.uniform(kadj, (N, N), jnp.float32)
    adj = (a + a.T) * 0.5 / N

    params = init_gcn_params(kparam, hidden_channels, num_layers,
                             in_channels, out_channels)

    forward = jax.jit(gcn_forward)
    out = forward(x, adj, params)
    out = jax.block_until_ready(out)

    ref = gcn_reference(x, adj, params)
    assert out.shape == (N, out_channels)
    assert jnp.allclose(out, ref, atol=1e-4, rtol=1e-4), "mismatch vs reference"

    print("KERNEL_OK")
</pallas_src>

<mosaic_0001>
module attributes {stable_mosaic.version = 11 : i64} {
  func.func @_gcn_fused_kernel(%arg0: i32, %arg1: memref<16x16xf32, #tpu.memory_space<vmem>>, %arg2: memref<16x128xf32, #tpu.memory_space<vmem>>, %arg3: memref<3x128x128xf32, #tpu.memory_space<vmem>>, %arg4: memref<3x1x128xf32, #tpu.memory_space<vmem>>, %arg5: memref<16x128xf32, #tpu.memory_space<vmem>>) attributes {dimension_semantics = [#tpu.dimension_semantics<arbitrary>], iteration_bounds = array<i64: 1>, scalar_prefetch = 0 : i64, scratch_operands = 0 : i64, tpu.core_type = #tpu.core_type<tc>, window_params = [{pipeline_mode = #tpu.pipeline_mode<synchronous>, transform_indices = @transform_0, window_bounds = array<i64: 16, 16>}, {pipeline_mode = #tpu.pipeline_mode<synchronous>, transform_indices = @transform_1, window_bounds = array<i64: 16, 128>}, {pipeline_mode = #tpu.pipeline_mode<synchronous>, transform_indices = @transform_2, window_bounds = array<i64: 3, 128, 128>}, {pipeline_mode = #tpu.pipeline_mode<synchronous>, transform_indices = @transform_3, window_bounds = array<i64: 3, 1, 128>}, {pipeline_mode = #tpu.pipeline_mode<synchronous>, transform_indices = @transform_4, window_bounds = array<i64: 16, 128>}]} {
    %c0 = arith.constant 0 : index
    %c0_0 = arith.constant 0 : index
    %0 = vector.load %arg1[%c0, %c0_0] : memref<16x16xf32, #tpu.memory_space<vmem>>, vector<16x16xf32>
    %c0_1 = arith.constant 0 : index
    %c0_2 = arith.constant 0 : index
    %1 = vector.load %arg2[%c0_1, %c0_2] : memref<16x128xf32, #tpu.memory_space<vmem>>, vector<16x128xf32>
    %c0_3 = arith.constant 0 : index
    %c0_4 = arith.constant 0 : index
    %c0_5 = arith.constant 0 : index
    %2 = vector.load %arg3[%c0_3, %c0_4, %c0_5] : memref<3x128x128xf32, #tpu.memory_space<vmem>>, vector<1x128x128xf32>
    %3 = vector.shape_cast %2 : vector<1x128x128xf32> to vector<128x128xf32>
    %c0_6 = arith.constant 0 : index
    %c0_7 = arith.constant 0 : index
    %c0_8 = arith.constant 0 : index
    %4 = vector.load %arg4[%c0_6, %c0_7, %c0_8] : memref<3x1x128xf32, #tpu.memory_space<vmem>>, vector<1x1x128xf32>
    %5 = vector.shape_cast %4 : vector<1x1x128xf32> to vector<1x128xf32>
    %cst = arith.constant dense<0.000000e+00> : vector<16x128xf32>
    %6 = tpu.matmul %0, %1, %cst {dimension_numbers = #tpu.dot_dimension_numbers<[1], [0], [0], [1], [0, 0, 1, 1], [], []>} : vector<16x16xf32>, vector<16x128xf32>, vector<16x128xf32> -> vector<16x128xf32>
    %cst_9 = arith.constant dense<0.000000e+00> : vector<16x128xf32>
    %7 = tpu.matmul %6, %3, %cst_9 {dimension_numbers = #tpu.dot_dimension_numbers<[1], [0], [0], [1], [0, 0, 1, 1], [], []>} : vector<16x128xf32>, vector<128x128xf32>, vector<16x128xf32> -> vector<16x128xf32>
    %8 = vector.broadcast %5 : vector<1x128xf32> to vector<16x128xf32>
    %9 = arith.addf %7, %8 : vector<16x128xf32>
    %cst_10 = arith.constant 0.000000e+00 : f32
    %10 = vector.broadcast %cst_10 : f32 to vector<16x128xf32>
    %11 = arith.maximumf %9, %10 : vector<16x128xf32>
    %c1 = arith.constant 1 : index
    %c0_11 = arith.constant 0 : index
    %c0_12 = arith.constant 0 : index
    %12 = vector.load %arg3[%c1, %c0_11, %c0_12] : memref<3x128x128xf32, #tpu.memory_space<vmem>>, vector<1x128x128xf32>
    %13 = vector.shape_cast %12 : vector<1x128x128xf32> to vector<128x128xf32>
    %c1_13 = arith.constant 1 : index
    %c0_14 = arith.constant 0 : index
    %c0_15 = arith.constant 0 : index
    %14 = vector.load %arg4[%c1_13, %c0_14, %c0_15] : memref<3x1x128xf32, #tpu.memory_space<vmem>>, vector<1x1x128xf32>
    %15 = vector.shape_cast %14 : vector<1x1x128xf32> to vector<1x128xf32>
    %cst_16 = arith.constant dense<0.000000e+00> : vector<16x128xf32>
    %16 = tpu.matmul %0, %11, %cst_16 {dimension_numbers = #tpu.dot_dimension_numbers<[1], [0], [0], [1], [0, 0, 1, 1], [], []>} : vector<16x16xf32>, vector<16x128xf32>, vector<16x128xf32> -> vector<16x128xf32>
    %cst_17 = arith.constant dense<0.000000e+00> : vector<16x128xf32>
    %17 = tpu.matmul %16, %13, %cst_17 {dimension_numbers = #tpu.dot_dimension_numbers<[1], [0], [0], [1], [0, 0, 1, 1], [], []>} : vector<16x128xf32>, vector<128x128xf32>, vector<16x128xf32> -> vector<16x128xf32>
    %18 = vector.broadcast %15 : vector<1x128xf32> to vector<16x128xf32>
    %19 = arith.addf %17, %18 : vector<16x128xf32>
    %cst_18 = arith.constant 0.000000e+00 : f32
    %20 = vector.broadcast %cst_18 : f32 to vector<16x128xf32>
    %21 = arith.maximumf %19, %20 : vector<16x128xf32>
    %c2 = arith.constant 2 : index
    %c0_19 = arith.constant 0 : index
    %c0_20 = arith.constant 0 : index
    %22 = vector.load %arg3[%c2, %c0_19, %c0_20] : memref<3x128x128xf32, #tpu.memory_space<vmem>>, vector<1x128x128xf32>
    %23 = vector.shape_cast %22 : vector<1x128x128xf32> to vector<128x128xf32>
    %c2_21 = arith.constant 2 : index
    %c0_22 = arith.constant 0 : index
    %c0_23 = arith.constant 0 : index
    %24 = vector.load %arg4[%c2_21, %c0_22, %c0_23] : memref<3x1x128xf32, #tpu.memory_space<vmem>>, vector<1x1x128xf32>
    %25 = vector.shape_cast %24 : vector<1x1x128xf32> to vector<1x128xf32>
    %cst_24 = arith.constant dense<0.000000e+00> : vector<16x128xf32>
    %26 = tpu.matmul %21, %23, %cst_24 {dimension_numbers = #tpu.dot_dimension_numbers<[1], [0], [0], [1], [0, 0, 1, 1], [], []>} : vector<16x128xf32>, vector<128x128xf32>, vector<16x128xf32> -> vector<16x128xf32>
    %cst_25 = arith.constant dense<0.000000e+00> : vector<16x128xf32>
    %27 = tpu.matmul %0, %26, %cst_25 {dimension_numbers = #tpu.dot_dimension_numbers<[1], [0], [0], [1], [0, 0, 1, 1], [], []>} : vector<16x16xf32>, vector<16x128xf32>, vector<16x128xf32> -> vector<16x128xf32>
    %28 = vector.broadcast %25 : vector<1x128xf32> to vector<16x128xf32>
    %29 = arith.addf %27, %28 : vector<16x128xf32>
    %c0_26 = arith.constant 0 : index
    %c0_27 = arith.constant 0 : index
    %30 = vector.load %arg5[%c0_26, %c0_27] : memref<16x128xf32, #tpu.memory_space<vmem>>, vector<16x128xf32>
    tpu.vector_store %arg5[%c0_26, %c0_27], %29 {strides = array<i32>} : memref<16x128xf32, #tpu.memory_space<vmem>>, vector<16x128xf32>,
    return
  }
  func.func @transform_0(%arg0: i32) -> (i32, i32) {
    %c0_i32 = arith.constant 0 : i32
    %c0_i32_0 = arith.constant 0 : i32
    %c0_i32_1 = arith.constant 0 : i32
    return %c0_i32, %c0_i32_0 : i32, i32
  }
  func.func @transform_1(%arg0: i32) -> (i32, i32) {
    %c0_i32 = arith.constant 0 : i32
    %c0_i32_0 = arith.constant 0 : i32
    %c0_i32_1 = arith.constant 0 : i32
    return %c0_i32, %c0_i32_0 : i32, i32
  }
  func.func @transform_2(%arg0: i32) -> (i32, i32, i32) {
    %c0_i32 = arith.constant 0 : i32
    %c0_i32_0 = arith.constant 0 : i32
    %c0_i32_1 = arith.constant 0 : i32
    %c0_i32_2 = arith.constant 0 : i32
    return %c0_i32, %c0_i32_0, %c0_i32_1 : i32, i32, i32
  }
  func.func @transform_3(%arg0: i32) -> (i32, i32, i32) {
    %c0_i32 = arith.constant 0 : i32
    %c0_i32_0 = arith.constant 0 : i32
    %c0_i32_1 = arith.constant 0 : i32
    %c0_i32_2 = arith.constant 0 : i32
    return %c0_i32, %c0_i32_0, %c0_i32_1 : i32, i32, i32
  }
  func.func @transform_4(%arg0: i32) -> (i32, i32) {
    %c0_i32 = arith.constant 0 : i32
    %c0_i32_0 = arith.constant 0 : i32
    %c0_i32_1 = arith.constant 0 : i32
    return %c0_i32, %c0_i32_0 : i32, i32
  }
}

</mosaic_0001>

<llo_original>
// kernel: gcn_forward.1
$region0: #{gcn_forward.1}
  #allocation0 [shape = 'u32[]', space=smem, size = 0x4, offset = 0x4, fixed_abs, tag = 'smem constant byte address 0x4 - core index']
  #allocation1 [shape = 'u32[144,128]{1,0:T(1,128)}', space=vmem, size = 0x12000, scoped, tag = 'internal scratch']
  %s0 = inlined_call_operand.vmem [shape: f32[16,16], index: 0, kind: input, shape index: {}]
  %s1 = inlined_call_operand.vmem [shape: f32[16,128], index: 1, kind: input, shape index: {}]
  %s2 = inlined_call_operand.vmem [shape: f32[3,128,128], index: 2, kind: input, shape index: {}]
  %s3 = inlined_call_operand.vmem [shape: f32[3,1,128], index: 3, kind: input, shape index: {}]
  %s4 = inlined_call_operand.vmem [shape: f32[16,128], index: 4, kind: output, shape index: {}]
  %s5 = sld [smem:[#allocation0]]
  $region26: #{gcn_forward.1} parent=0
    _
  %s7 = ssub.s32 1, %s5
  %s8 = scalar_select 0, %s7, %s5
  // Predicated region
  $region2: #{gcn_forward.1} parent=0 // pred_check
    _
  $region3: #{gcn_forward.1} parent=0 // pred_check_branch
    %10 = sbr.rel (0) target = $region5
  $region4: #{gcn_forward.1} parent=0 // pred_region
    _
  $region5: #{gcn_forward.1} parent=0 // pred_fallthru
    _
  // Predicated region
  $region6: #{gcn_forward.1} parent=0 // pred_check
    _
  $region7: #{gcn_forward.1} parent=0 // pred_check_branch
    %12 = sbr.rel (0) target = $region9
  $region8: #{gcn_forward.1} parent=0 // pred_region
    _
  $region9: #{gcn_forward.1} parent=0 // pred_fallthru
    _
  // Predicated region
  $region10: #{gcn_forward.1} parent=0 // pred_check
    _
  $region11: #{gcn_forward.1} parent=0 // pred_check_branch
    %14 = sbr.rel (0) target = $region13
  $region12: #{gcn_forward.1} parent=0 // pred_region
    _
  $region13: #{gcn_forward.1} parent=0 // pred_fallthru
    _
  // Predicated region
  $region14: #{gcn_forward.1} parent=0 // pred_check
    _
  $region15: #{gcn_forward.1} parent=0 // pred_check_branch
    %16 = sbr.rel (0) target = $region17
  $region16: #{gcn_forward.1} parent=0 // pred_region
    _
  $region17: #{gcn_forward.1} parent=0 // pred_fallthru
    _
  %v17 = vld [vmem:[%s0] sm:$0xff]
  %v18 = vld [vmem:[%s0 + $0x8] sm:$0xff]
  %v19 = vld [vmem:[%s1] sm:$0xff]
  %v20 = vld [vmem:[%s1 + $0x8] sm:$0xff]
  %v21 = vld [vmem:[%s2] sm:$0xff]
  %v22 = vld [vmem:[%s2 + $0x8] sm:$0xff]
  %v23 = vld [vmem:[%s2 + $0x10] sm:$0xff]
  %v24 = vld [vmem:[%s2 + $0x18] sm:$0xff]
  %v25 = vld [vmem:[%s2 + $0x20] sm:$0xff]
  %v26 = vld [vmem:[%s2 + $0x28] sm:$0xff]
  %v27 = vld [vmem:[%s2 + $0x30] sm:$0xff]
  %v28 = vld [vmem:[%s2 + $0x38] sm:$0xff]
  %v29 = vld [vmem:[%s2 + $0x40] sm:$0xff]
  %v30 = vld [vmem:[%s2 + $0x48] sm:$0xff]
  %v31 = vld [vmem:[%s2 + $0x50] sm:$0xff]
  %v32 = vld [vmem:[%s2 + $0x58] sm:$0xff]
  %v33 = vld [vmem:[%s2 + $0x60] sm:$0xff]
  %v34 = vld [vmem:[%s2 + $0x68] sm:$0xff]
  %v35 = vld [vmem:[%s2 + $0x70] sm:$0xff]
  %v36 = vld [vmem:[%s2 + $0x78] sm:$0xff]
  %v37 = vld [vmem:[%s3] sm:$0x1]
  %vm38 = vcmask 130048
  %v40 = vsel %vm38, %v17, 0
  %v43 = vsel %vm38, %v18, 0
  %45 = vmatprep.subr.mxu0 0.0
  %46 = vmatpush1.msra.mxu0 0.0
  %47 = vmatprep.subr.mxu0 0.0
  %48 = vmatpush1.msra.mxu0 0.0
  %49 = vmatprep.subr.mxu0 0.0
  %50 = vmatpush1.msra.mxu0 0.0
  %51 = vmatprep.subr.mxu0 0.0
  %52 = vmatpush1.msra.mxu0 0.0
  %53 = vmatprep.subr.mxu0 0.0
  %54 = vmatpush1.msra.mxu0 0.0
  %55 = vmatprep.subr.mxu0 0.0
  %56 = vmatpush1.msra.mxu0 0.0
  %57 = vmatprep.subr.mxu0 0.0
  %58 = vmatpush1.msra.mxu0 0.0
  %59 = vmatprep.subr.mxu0 0.0
  %60 = vmatpush1.msra.mxu0 0.0
  %61 = vmatprep.subr.mxu0 0.0
  %62 = vmatpush1.msra.mxu0 0.0
  %63 = vmatprep.subr.mxu0 0.0
  %64 = vmatpush1.msra.mxu0 0.0
  %65 = vmatprep.subr.mxu0 0.0
  %66 = vmatpush1.msra.mxu0 0.0
  %67 = vmatprep.subr.mxu0 0.0
  %68 = vmatpush1.msra.mxu0 0.0
  %69 = vmatprep.subr.mxu0 0.0
  %70 = vmatpush1.msra.mxu0 0.0
  %71 = vmatprep.subr.mxu0 0.0
  %72 = vmatpush1.msra.mxu0 0.0
  %73 = vmatprep.subr.mxu0 0.0
  %74 = vmatpush1.msra.mxu0 %v20
  %75 = vmatprep.subr.mxu0 0.0
  %76 = vmatpush1.msra.mxu0 %v19
  %77 = vmatprep.subr.mxu0 0.0
  %78 = vmatpush2.msra.mxu0 0.0
  %79 = vmatprep.subr.mxu0 0.0
  %80 = vmatpush2.msra.mxu0 0.0
  %81 = vmatprep.subr.mxu0 0.0
  %82 = vmatpush2.msra.mxu0 0.0
  %83 = vmatprep.subr.mxu0 0.0
  %84 = vmatpush2.msra.mxu0 0.0
  %85 = vmatprep.subr.mxu0 0.0
  %86 = vmatpush2.msra.mxu0 0.0
  %87 = vmatprep.subr.mxu0 0.0
  %88 = vmatpush2.msra.mxu0 0.0
  %89 = vmatprep.subr.mxu0 0.0
  %90 = vmatpush2.msra.mxu0 0.0
  %91 = vmatprep.subr.mxu0 0.0
  %92 = vmatpush2.msra.mxu0 0.0
  %93 = vmatprep.subr.mxu0 0.0
  %94 = vmatpush2.msra.mxu0 0.0
  %95 = vmatprep.subr.mxu0 0.0
  %96 = vmatpush2.msra.mxu0 0.0
  %97 = vmatprep.subr.mxu0 0.0
  %98 = vmatpush2.msra.mxu0 0.0
  %99 = vmatprep.subr.mxu0 0.0
  %100 = vmatpush2.msra.mxu0 0.0
  %101 = vmatprep.subr.mxu0 0.0
  %102 = vmatpush2.msra.mxu0 0.0
  %103 = vmatprep.subr.mxu0 0.0
  %104 = vmatpush2.msra.mxu0 0.0
  %105 = vmatprep.subr.mxu0 0.0
  %106 = vmatpush2.msra.mxu0 0.0
  %107 = vmatprep.subr.mxu0 0.0
  %108 = vmatpush2.msra.mxu0 0.0
  %109 = vmatprep.mubr.f32.mxu0 0.0
  %110 = vmatmul.mubr.f32.gmra.mxu0 %v40
  %v111 = vpop.f32.mrf.mxu0
  %v112 = vadd.f32 0.0, %v111
  %v113 = vpop.f32.mrf.mxu0
  %114 = vmatprep.mubr.f32.mxu0 0.0
  %115 = vmatmul.mubr.f32.gmra.mxu0 %v43
  %v116 = vpop.f32.mrf.mxu0
  %v117 = vadd.f32 0.0, %v116
  %v118 = vpop.f32.mrf.mxu0
  %119 = vdwg.mxu0
  %v121 = vlaneseq
  %v122 = vshrl.u32 %v121, 7
  %v123 = vsub.s32 0, %v122
  %v124 = vrot.slane %v37, %v123
  %126 = vmatprep.subr.mxu0 0.0
  %127 = vmatpush1.msra.mxu0 %v36
  %128 = vmatprep.subr.mxu0 0.0
  %129 = vmatpush1.msra.mxu0 %v35
  %130 = vmatprep.subr.mxu0 0.0
  %131 = vmatpush1.msra.mxu0 %v34
  %132 = vmatprep.subr.mxu0 0.0
  %133 = vmatpush1.msra.mxu0 %v33
  %134 = vmatprep.subr.mxu0 0.0
  %135 = vmatpush1.msra.mxu0 %v32
  %136 = vmatprep.subr.mxu0 0.0
  %137 = vmatpush1.msra.mxu0 %v31
  %138 = vmatprep.subr.mxu0 0.0
  %139 = vmatpush1.msra.mxu0 %v30
  %140 = vmatprep.subr.mxu0 0.0
  %141 = vmatpush1.msra.mxu0 %v29
  %142 = vmatprep.subr.mxu0 0.0
  %143 = vmatpush1.msra.mxu0 %v28
  %144 = vmatprep.subr.mxu0 0.0
  %145 = vmatpush1.msra.mxu0 %v27
  %146 = vmatprep.subr.mxu0 0.0
  %147 = vmatpush1.msra.mxu0 %v26
  %148 = vmatprep.subr.mxu0 0.0
  %149 = vmatpush1.msra.mxu0 %v25
  %150 = vmatprep.subr.mxu0 0.0
  %151 = vmatpush1.msra.mxu0 %v24
  %152 = vmatprep.subr.mxu0 0.0
  %153 = vmatpush1.msra.mxu0 %v23
  %154 = vmatprep.subr.mxu0 0.0
  %155 = vmatpush1.msra.mxu0 %v22
  %156 = vmatprep.subr.mxu0 0.0
  %157 = vmatpush1.msra.mxu0 %v21
  %158 = vmatprep.subr.mxu0 0.0
  %159 = vmatpush2.msra.mxu0 0.0
  %160 = vmatprep.subr.mxu0 0.0
  %161 = vmatpush2.msra.mxu0 0.0
  %162 = vmatprep.subr.mxu0 0.0
  %163 = vmatpush2.msra.mxu0 0.0
  %164 = vmatprep.subr.mxu0 0.0
  %165 = vmatpush2.msra.mxu0 0.0
  %166 = vmatprep.subr.mxu0 0.0
  %167 = vmatpush2.msra.mxu0 0.0
  %168 = vmatprep.subr.mxu0 0.0
  %169 = vmatpush2.msra.mxu0 0.0
  %170 = vmatprep.subr.mxu0 0.0
  %171 = vmatpush2.msra.mxu0 0.0
  %172 = vmatprep.subr.mxu0 0.0
  %173 = vmatpush2.msra.mxu0 0.0
  %174 = vmatprep.subr.mxu0 0.0
  %175 = vmatpush2.msra.mxu0 0.0
  %176 = vmatprep.subr.mxu0 0.0
  %177 = vmatpush2.msra.mxu0 0.0
  %178 = vmatprep.subr.mxu0 0.0
  %179 = vmatpush2.msra.mxu0 0.0
  %180 = vmatprep.subr.mxu0 0.0
  %181 = vmatpush2.msra.mxu0 0.0
  %182 = vmatprep.subr.mxu0 0.0
  %183 = vmatpush2.msra.mxu0 0.0
  %184 = vmatprep.subr.mxu0 0.0
  %185 = vmatpush2.msra.mxu0 0.0
  %186 = vmatprep.subr.mxu0 0.0
  %187 = vmatpush2.msra.mxu0 0.0
  %188 = vmatprep.subr.mxu0 0.0
  %189 = vmatpush2.msra.mxu0 0.0
  %190 = vmatprep.mubr.f32.mxu0 0.0
  %191 = vmatmul.mubr.f32.gmra.mxu0 %v112
  %v192 = vpop.f32.mrf.mxu0
  %v193 = vadd.f32 %v124, %v192
  %v194 = vpop.f32.mrf.mxu0
  %195 = vmatprep.mubr.f32.mxu0 0.0
  %196 = vmatmul.mubr.f32.gmra.mxu0 %v117
  %v197 = vpop.f32.mrf.mxu0
  %v198 = vadd.f32 %v124, %v197
  %v199 = vpop.f32.mrf.mxu0
  %200 = vdwg.mxu0
  %v201 = vmax.f32 %v193, 0.0
  %v202 = vmax.f32 %v198, 0.0
  %s203 = scalar_lea.vmem %s2, 128
  %v204 = vld [vmem:[%s203] sm:$0xff]
  %v205 = vld [vmem:[%s203 + $0x8] sm:$0xff]
  %v206 = vld [vmem:[%s203 + $0x10] sm:$0xff]
  %v207 = vld [vmem:[%s203 + $0x18] sm:$0xff]
  %v208 = vld [vmem:[%s203 + $0x20] sm:$0xff]
  %v209 = vld [vmem:[%s203 + $0x28] sm:$0xff]
  %v210 = vld [vmem:[%s203 + $0x30] sm:$0xff]
  %v211 = vld [vmem:[%s203 + $0x38] sm:$0xff]
  %v212 = vld [vmem:[%s203 + $0x40] sm:$0xff]
  %v213 = vld [vmem:[%s203 + $0x48] sm:$0xff]
  %v214 = vld [vmem:[%s203 + $0x50] sm:$0xff]
  %v215 = vld [vmem:[%s203 + $0x58] sm:$0xff]
  %v216 = vld [vmem:[%s203 + $0x60] sm:$0xff]
  %v217 = vld [vmem:[%s203 + $0x68] sm:$0xff]
  %v218 = vld [vmem:[%s203 + $0x70] sm:$0xff]
  %v219 = vld [vmem:[%s203 + $0x78] sm:$0xff]
  %s220 = scalar_lea.vmem %s3, 1
  %v221 = vld [vmem:[%s220] sm:$0x1]
  %222 = vmatprep.subr.mxu0 0.0
  %223 = vmatpush1.msra.mxu0 0.0
  %224 = vmatprep.subr.mxu0 0.0
  %225 = vmatpush1.msra.mxu0 0.0
  %226 = vmatprep.subr.mxu0 0.0
  %227 = vmatpush1.msra.mxu0 0.0
  %228 = vmatprep.subr.mxu0 0.0
  %229 = vmatpush1.msra.mxu0 0.0
  %230 = vmatprep.subr.mxu0 0.0
  %231 = vmatpush1.msra.mxu0 0.0
  %232 = vmatprep.subr.mxu0 0.0
  %233 = vmatpush1.msra.mxu0 0.0
  %234 = vmatprep.subr.mxu0 0.0
  %235 = vmatpush1.msra.mxu0 0.0
  %236 = vmatprep.subr.mxu0 0.0
  %237 = vmatpush1.msra.mxu0 0.0
  %238 = vmatprep.subr.mxu0 0.0
  %239 = vmatpush1.msra.mxu0 0.0
  %240 = vmatprep.subr.mxu0 0.0
  %241 = vmatpush1.msra.mxu0 0.0
  %242 = vmatprep.subr.mxu0 0.0
  %243 = vmatpush1.msra.mxu0 0.0
  %244 = vmatprep.subr.mxu0 0.0
  %245 = vmatpush1.msra.mxu0 0.0
  %246 = vmatprep.subr.mxu0 0.0
  %247 = vmatpush1.msra.mxu0 0.0
  %248 = vmatprep.subr.mxu0 0.0
  %249 = vmatpush1.msra.mxu0 0.0
  %250 = vmatprep.subr.mxu0 0.0
  %251 = vmatpush1.msra.mxu0 %v202
  %252 = vmatprep.subr.mxu0 0.0
  %253 = vmatpush1.msra.mxu0 %v201
  %254 = vmatprep.subr.mxu0 0.0
  %255 = vmatpush2.msra.mxu0 0.0
  %256 = vmatprep.subr.mxu0 0.0
  %257 = vmatpush2.msra.mxu0 0.0
  %258 = vmatprep.subr.mxu0 0.0
  %259 = vmatpush2.msra.mxu0 0.0
  %260 = vmatprep.subr.mxu0 0.0
  %261 = vmatpush2.msra.mxu0 0.0
  %262 = vmatprep.subr.mxu0 0.0
  %263 = vmatpush2.msra.mxu0 0.0
  %264 = vmatprep.subr.mxu0 0.0
  %265 = vmatpush2.msra.mxu0 0.0
  %266 = vmatprep.subr.mxu0 0.0
  %267 = vmatpush2.msra.mxu0 0.0
  %268 = vmatprep.subr.mxu0 0.0
  %269 = vmatpush2.msra.mxu0 0.0
  %270 = vmatprep.subr.mxu0 0.0
  %271 = vmatpush2.msra.mxu0 0.0
  %272 = vmatprep.subr.mxu0 0.0
  %273 = vmatpush2.msra.mxu0 0.0
  %274 = vmatprep.subr.mxu0 0.0
  %275 = vmatpush2.msra.mxu0 0.0
  %276 = vmatprep.subr.mxu0 0.0
  %277 = vmatpush2.msra.mxu0 0.0
  %278 = vmatprep.subr.mxu0 0.0
  %279 = vmatpush2.msra.mxu0 0.0
  %280 = vmatprep.subr.mxu0 0.0
  %281 = vmatpush2.msra.mxu0 0.0
  %282 = vmatprep.subr.mxu0 0.0
  %283 = vmatpush2.msra.mxu0 0.0
  %284 = vmatprep.subr.mxu0 0.0
  %285 = vmatpush2.msra.mxu0 0.0
  %286 = vmatprep.mubr.f32.mxu0 0.0
  %287 = vmatmul.mubr.f32.gmra.mxu0 %v40
  %v288 = vpop.f32.mrf.mxu0
  %v289 = vadd.f32 0.0, %v288
  %v290 = vpop.f32.mrf.mxu0
  %291 = vmatprep.mubr.f32.mxu0 0.0
  %292 = vmatmul.mubr.f32.gmra.mxu0 %v43
  %v293 = vpop.f32.mrf.mxu0
  %v294 = vadd.f32 0.0, %v293
  %v295 = vpop.f32.mrf.mxu0
  %296 = vdwg.mxu0
  %v298 = vlaneseq
  %v299 = vshrl.u32 %v298, 7
  %v300 = vsub.s32 0, %v299
  %v301 = vrot.slane %v221, %v300
  %303 = vmatprep.subr.mxu0 0.0
  %304 = vmatpush1.msra.mxu0 %v219
  %305 = vmatprep.subr.mxu0 0.0
  %306 = vmatpush1.msra.mxu0 %v218
  %307 = vmatprep.subr.mxu0 0.0
  %308 = vmatpush1.msra.mxu0 %v217
  %309 = vmatprep.subr.mxu0 0.0
  %310 = vmatpush1.msra.mxu0 %v216
  %311 = vmatprep.subr.mxu0 0.0
  %312 = vmatpush1.msra.mxu0 %v215
  %313 = vmatprep.subr.mxu0 0.0
  %314 = vmatpush1.msra.mxu0 %v214
  %315 = vmatprep.subr.mxu0 0.0
  %316 = vmatpush1.msra.mxu0 %v213
  %317 = vmatprep.subr.mxu0 0.0
  %318 = vmatpush1.msra.mxu0 %v212
  %319 = vmatprep.subr.mxu0 0.0
  %320 = vmatpush1.msra.mxu0 %v211
  %321 = vmatprep.subr.mxu0 0.0
  %322 = vmatpush1.msra.mxu0 %v210
  %323 = vmatprep.subr.mxu0 0.0
  %324 = vmatpush1.msra.mxu0 %v209
  %325 = vmatprep.subr.mxu0 0.0
  %326 = vmatpush1.msra.mxu0 %v208
  %327 = vmatprep.subr.mxu0 0.0
  %328 = vmatpush1.msra.mxu0 %v207
  %329 = vmatprep.subr.mxu0 0.0
  %330 = vmatpush1.msra.mxu0 %v206
  %331 = vmatprep.subr.mxu0 0.0
  %332 = vmatpush1.msra.mxu0 %v205
  %333 = vmatprep.subr.mxu0 0.0
  %334 = vmatpush1.msra.mxu0 %v204
  %335 = vmatprep.subr.mxu0 0.0
  %336 = vmatpush2.msra.mxu0 0.0
  %337 = vmatprep.subr.mxu0 0.0
  %338 = vmatpush2.msra.mxu0 0.0
  %339 = vmatprep.subr.mxu0 0.0
  %340 = vmatpush2.msra.mxu0 0.0
  %341 = vmatprep.subr.mxu0 0.0
  %342 = vmatpush2.msra.mxu0 0.0
  %343 = vmatprep.subr.mxu0 0.0
  %344 = vmatpush2.msra.mxu0 0.0
  %345 = vmatprep.subr.mxu0 0.0
  %346 = vmatpush2.msra.mxu0 0.0
  %347 = vmatprep.subr.mxu0 0.0
  %348 = vmatpush2.msra.mxu0 0.0
  %349 = vmatprep.subr.mxu0 0.0
  %350 = vmatpush2.msra.mxu0 0.0
  %351 = vmatprep.subr.mxu0 0.0
  %352 = vmatpush2.msra.mxu0 0.0
  %353 = vmatprep.subr.mxu0 0.0
  %354 = vmatpush2.msra.mxu0 0.0
  %355 = vmatprep.subr.mxu0 0.0
  %356 = vmatpush2.msra.mxu0 0.0
  %357 = vmatprep.subr.mxu0 0.0
  %358 = vmatpush2.msra.mxu0 0.0
  %359 = vmatprep.subr.mxu0 0.0
  %360 = vmatpush2.msra.mxu0 0.0
  %361 = vmatprep.subr.mxu0 0.0
  %362 = vmatpush2.msra.mxu0 0.0
  %363 = vmatprep.subr.mxu0 0.0
  %364 = vmatpush2.msra.mxu0 0.0
  %365 = vmatprep.subr.mxu0 0.0
  %366 = vmatpush2.msra.mxu0 0.0
  %367 = vmatprep.mubr.f32.mxu0 0.0
  %368 = vmatmul.mubr.f32.gmra.mxu0 %v289
  %v369 = vpop.f32.mrf.mxu0
  %v370 = vadd.f32 %v301, %v369
  %v371 = vpop.f32.mrf.mxu0
  %372 = vmatprep.mubr.f32.mxu0 0.0
  %373 = vmatmul.mubr.f32.gmra.mxu0 %v294
  %v374 = vpop.f32.mrf.mxu0
  %v375 = vadd.f32 %v301, %v374
  %v376 = vpop.f32.mrf.mxu0
  %377 = vdwg.mxu0
  %v378 = vmax.f32 %v370, 0.0
  %v379 = vmax.f32 %v375, 0.0
  %s380 = scalar_lea.vmem %s2, 256
  %v381 = vld [vmem:[%s380] sm:$0xff]
  %v382 = vld [vmem:[%s380 + $0x8] sm:$0xff]
  %v383 = vld [vmem:[%s380 + $0x10] sm:$0xff]
  %v384 = vld [vmem:[%s380 + $0x18] sm:$0xff]
  %v385 = vld [vmem:[%s380 + $0x20] sm:$0xff]
  %v386 = vld [vmem:[%s380 + $0x28] sm:$0xff]
  %v387 = vld [vmem:[%s380 + $0x30] sm:$0xff]
  %v388 = vld [vmem:[%s380 + $0x38] sm:$0xff]
  %v389 = vld [vmem:[%s380 + $0x40] sm:$0xff]
  %v390 = vld [vmem:[%s380 + $0x48] sm:$0xff]
  %v391 = vld [vmem:[%s380 + $0x50] sm:$0xff]
  %v392 = vld [vmem:[%s380 + $0x58] sm:$0xff]
  %v393 = vld [vmem:[%s380 + $0x60] sm:$0xff]
  %v394 = vld [vmem:[%s380 + $0x68] sm:$0xff]
  %v395 = vld [vmem:[%s380 + $0x70] sm:$0xff]
  %v396 = vld [vmem:[%s380 + $0x78] sm:$0xff]
  %s397 = scalar_lea.vmem %s3, 2
  %v398 = vld [vmem:[%s397] sm:$0x1]
  %399 = vmatprep.subr.mxu0 0.0
  %400 = vmatpush1.msra.mxu0 %v396
  %401 = vmatprep.subr.mxu0 0.0
  %402 = vmatpush1.msra.mxu0 %v395
  %403 = vmatprep.subr.mxu0 0.0
  %404 = vmatpush1.msra.mxu0 %v394
  %405 = vmatprep.subr.mxu0 0.0
  %406 = vmatpush1.msra.mxu0 %v393
  %407 = vmatprep.subr.mxu0 0.0
  %408 = vmatpush1.msra.mxu0 %v392
  %409 = vmatprep.subr.mxu0 0.0
  %410 = vmatpush1.msra.mxu0 %v391
  %411 = vmatprep.subr.mxu0 0.0
  %412 = vmatpush1.msra.mxu0 %v390
  %413 = vmatprep.subr.mxu0 0.0
  %414 = vmatpush1.msra.mxu0 %v389
  %415 = vmatprep.subr.mxu0 0.0
  %416 = vmatpush1.msra.mxu0 %v388
  %417 = vmatprep.subr.mxu0 0.0
  %418 = vmatpush1.msra.mxu0 %v387
  %419 = vmatprep.subr.mxu0 0.0
  %420 = vmatpush1.msra.mxu0 %v386
  %421 = vmatprep.subr.mxu0 0.0
  %422 = vmatpush1.msra.mxu0 %v385
  %423 = vmatprep.subr.mxu0 0.0
  %424 = vmatpush1.msra.mxu0 %v384
  %425 = vmatprep.subr.mxu0 0.0
  %426 = vmatpush1.msra.mxu0 %v383
  %427 = vmatprep.subr.mxu0 0.0
  %428 = vmatpush1.msra.mxu0 %v382
  %429 = vmatprep.subr.mxu0 0.0
  %430 = vmatpush1.msra.mxu0 %v381
  %431 = vmatprep.subr.mxu0 0.0
  %432 = vmatpush2.msra.mxu0 0.0
  %433 = vmatprep.subr.mxu0 0.0
  %434 = vmatpush2.msra.mxu0 0.0
  %435 = vmatprep.subr.mxu0 0.0
  %436 = vmatpush2.msra.mxu0 0.0
  %437 = vmatprep.subr.mxu0 0.0
  %438 = vmatpush2.msra.mxu0 0.0
  %439 = vmatprep.subr.mxu0 0.0
  %440 = vmatpush2.msra.mxu0 0.0
  %441 = vmatprep.subr.mxu0 0.0
  %442 = vmatpush2.msra.mxu0 0.0
  %443 = vmatprep.subr.mxu0 0.0
  %444 = vmatpush2.msra.mxu0 0.0
  %445 = vmatprep.subr.mxu0 0.0
  %446 = vmatpush2.msra.mxu0 0.0
  %447 = vmatprep.subr.mxu0 0.0
  %448 = vmatpush2.msra.mxu0 0.0
  %449 = vmatprep.subr.mxu0 0.0
  %450 = vmatpush2.msra.mxu0 0.0
  %451 = vmatprep.subr.mxu0 0.0
  %452 = vmatpush2.msra.mxu0 0.0
  %453 = vmatprep.subr.mxu0 0.0
  %454 = vmatpush2.msra.mxu0 0.0
  %455 = vmatprep.subr.mxu0 0.0
  %456 = vmatpush2.msra.mxu0 0.0
  %457 = vmatprep.subr.mxu0 0.0
  %458 = vmatpush2.msra.mxu0 0.0
  %459 = vmatprep.subr.mxu0 0.0
  %460 = vmatpush2.msra.mxu0 0.0
  %461 = vmatprep.subr.mxu0 0.0
  %462 = vmatpush2.msra.mxu0 0.0
  %463 = vmatprep.mubr.f32.mxu0 0.0
  %464 = vmatmul.mubr.f32.gmra.mxu0 %v378
  %v465 = vpop.f32.mrf.mxu0
  %v466 = vadd.f32 0.0, %v465
  %v467 = vpop.f32.mrf.mxu0
  %468 = vmatprep.mubr.f32.mxu0 0.0
  %469 = vmatmul.mubr.f32.gmra.mxu0 %v379
  %v470 = vpop.f32.mrf.mxu0
  %v471 = vadd.f32 0.0, %v470
  %v472 = vpop.f32.mrf.mxu0
  %473 = vdwg.mxu0
  %v475 = vlaneseq
  %v476 = vshrl.u32 %v475, 7
  %v477 = vsub.s32 0, %v476
  %v478 = vrot.slane %v398, %v477
  %480 = vmatprep.subr.mxu0 0.0
  %481 = vmatpush1.msra.mxu0 0.0
  %482 = vmatprep.subr.mxu0 0.0
  %483 = vmatpush1.msra.mxu0 0.0
  %484 = vmatprep.subr.mxu0 0.0
  %485 = vmatpush1.msra.mxu0 0.0
  %486 = vmatprep.subr.mxu0 0.0
  %487 = vmatpush1.msra.mxu0 0.0
  %488 = vmatprep.subr.mxu0 0.0
  %489 = vmatpush1.msra.mxu0 0.0
  %490 = vmatprep.subr.mxu0 0.0
  %491 = vmatpush1.msra.mxu0 0.0
  %492 = vmatprep.subr.mxu0 0.0
  %493 = vmatpush1.msra.mxu0 0.0
  %494 = vmatprep.subr.mxu0 0.0
  %495 = vmatpush1.msra.mxu0 0.0
  %496 = vmatprep.subr.mxu0 0.0
  %497 = vmatpush1.msra.mxu0 0.0
  %498 = vmatprep.subr.mxu0 0.0
  %499 = vmatpush1.msra.mxu0 0.0
  %500 = vmatprep.subr.mxu0 0.0
  %501 = vmatpush1.msra.mxu0 0.0
  %502 = vmatprep.subr.mxu0 0.0
  %503 = vmatpush1.msra.mxu0 0.0
  %504 = vmatprep.subr.mxu0 0.0
  %505 = vmatpush1.msra.mxu0 0.0
  %506 = vmatprep.subr.mxu0 0.0
  %507 = vmatpush1.msra.mxu0 0.0
  %508 = vmatprep.subr.mxu0 0.0
  %509 = vmatpush1.msra.mxu0 %v471
  %510 = vmatprep.subr.mxu0 0.0
  %511 = vmatpush1.msra.mxu0 %v466
  %512 = vmatprep.subr.mxu0 0.0
  %513 = vmatpush2.msra.mxu0 0.0
  %514 = vmatprep.subr.mxu0 0.0
  %515 = vmatpush2.msra.mxu0 0.0
  %516 = vmatprep.subr.mxu0 0.0
  %517 = vmatpush2.msra.mxu0 0.0
  %518 = vmatprep.subr.mxu0 0.0
  %519 = vmatpush2.msra.mxu0 0.0
  %520 = vmatprep.subr.mxu0 0.0
  %521 = vmatpush2.msra.mxu0 0.0
  %522 = vmatprep.subr.mxu0 0.0
  %523 = vmatpush2.msra.mxu0 0.0
  %524 = vmatprep.subr.mxu0 0.0
  %525 = vmatpush2.msra.mxu0 0.0
  %526 = vmatprep.subr.mxu0 0.0
  %527 = vmatpush2.msra.mxu0 0.0
  %528 = vmatprep.subr.mxu0 0.0
  %529 = vmatpush2.msra.mxu0 0.0
  %530 = vmatprep.subr.mxu0 0.0
  %531 = vmatpush2.msra.mxu0 0.0
  %532 = vmatprep.subr.mxu0 0.0
  %533 = vmatpush2.msra.mxu0 0.0
  %534 = vmatprep.subr.mxu0 0.0
  %535 = vmatpush2.msra.mxu0 0.0
  %536 = vmatprep.subr.mxu0 0.0
  %537 = vmatpush2.msra.mxu0 0.0
  %538 = vmatprep.subr.mxu0 0.0
  %539 = vmatpush2.msra.mxu0 0.0
  %540 = vmatprep.subr.mxu0 0.0
  %541 = vmatpush2.msra.mxu0 0.0
  %542 = vmatprep.subr.mxu0 0.0
  %543 = vmatpush2.msra.mxu0 0.0
  %544 = vmatprep.mubr.f32.mxu0 0.0
  %545 = vmatmul.mubr.f32.gmra.mxu0 %v40
  %v546 = vpop.f32.mrf.mxu0
  %v547 = vadd.f32 %v478, %v546
  %v548 = vpop.f32.mrf.mxu0
  %549 = vmatprep.mubr.f32.mxu0 0.0
  %550 = vmatmul.mubr.f32.gmra.mxu0 %v43
  %v551 = vpop.f32.mrf.mxu0
  %v552 = vadd.f32 %v478, %v551
  %v553 = vpop.f32.mrf.mxu0
  %554 = vdwg.mxu0
  %555 = vst [vmem:[%s4] sm:$0xff] %v547
  %556 = vst [vmem:[%s4 + $0x8] sm:$0xff] %v552
  // Predicated region
  $region18: #{gcn_forward.1} parent=0 // pred_check
    _
  $region19: #{gcn_forward.1} parent=0 // pred_check_branch
    %558 = sbr.rel (0) target = $region21
  $region20: #{gcn_forward.1} parent=0 // pred_region
    _
  $region21: #{gcn_forward.1} parent=0 // pred_fallthru
    _
  // Predicated region
  $region22: #{gcn_forward.1} parent=0 // pred_check
    _
  $region23: #{gcn_forward.1} parent=0 // pred_check_branch
    %560 = sbr.rel (0) target = $region25
  $region24: #{gcn_forward.1} parent=0 // pred_region
    _
  $region25: #{gcn_forward.1} parent=0 // pred_fallthru
    _

</llo_original>
